<compile_context>
chip_gen: v5e
topology: v5e:2x2
jax: 0.10.0
libtpu: 0.0.40
codegen_flags: <defaults>
</compile_context>

<pallas_src>
import functools

import jax
import jax.numpy as jnp
from jax.experimental import pallas as pl
from jax.experimental.pallas import tpu as pltpu

_LANE = 128
_MAX_BLOCK_L = 16384                  # sanity cap; the VMEM budget usually binds first
_VMEM_HEADROOM = 2 * 1024 * 1024      # slack for Mosaic-internal scratch


def _vmem_limit_bytes():
    """Per-chip scoped-VMEM limit: ~3/4 of physical, capped at 96 MiB."""
    phys = 64 * 1024 * 1024           # conservative default (v7x per-TensorCore)
    try:
        info = pltpu.get_tpu_info()
        phys = int(getattr(info, "vmem_capacity_bytes", phys)) or phys
    except Exception:
        pass
    return int(min(phys * 3 // 4, 96 * 1024 * 1024))


def _projection_kernel(x_ref, w_ref, b_ref, o_ref):
    # x_ref: (c_in, tl)   w_ref: (d_model, c_in)   b_ref: (d_model, 1) f32
    # o_ref: (d_model, tl)
    acc = jnp.dot(w_ref[...], x_ref[...], preferred_element_type=jnp.float32)
    o_ref[...] = (acc + b_ref[...]).astype(o_ref.dtype)


def _default_block_l(length, c_in, d_model, itemsize, n_batch, vmem_limit,
                     single_buffer_params):
    """Pick a lane-aligned L tile sized against the real VMEM footprint."""
    if length <= _LANE:
        return int(length)            # full-extent block (allowed exception to the 128 rule)

    # Fixed cost: weight + bias buffers (x1 if single-buffered, x2 otherwise).
    param_bufs = 1 if single_buffer_params else 2
    fixed = param_bufs * (d_model * c_in * itemsize + d_model * 4)
    budget = max(vmem_limit - fixed - _VMEM_HEADROOM, 1 << 20)

    # Per-L-column cost: double-buffered x and out tiles + the f32 matmul result.
    per_col = 2 * (c_in + d_model) * itemsize + 4 * d_model
    tl = (budget // per_col) // _LANE * _LANE

    l_floor = (length // _LANE) * _LANE            # keep the block <= array extent
    tl = max(_LANE, min(tl, l_floor, _MAX_BLOCK_L))

    # Megacore balance (v7x has 2 TensorCores): aim for >= 4 parallel grid steps.
    if n_batch * pl.cdiv(length, tl) < 4:
        want_tiles = pl.cdiv(4, n_batch)
        tl_bal = pl.cdiv(pl.cdiv(length, want_tiles), _LANE) * _LANE
        tl = max(_LANE, min(tl, tl_bal))
    return int(tl)


@functools.partial(jax.jit, static_argnames=("block_l", "single_buffer_params"))
def _feature_projection(x, weight, bias, *, block_l, single_buffer_params):
    n, c_in, length = x.shape
    d_model = weight.shape[0]
    itemsize = jnp.dtype(x.dtype).itemsize

    # Tiny parameter reshapes only; no full-array transposes / pads of x.
    w2d = weight[:, :, 0].astype(x.dtype)                  # (d_model, c_in)
    b2d = bias.astype(jnp.float32).reshape(d_model, 1)     # (d_model, 1)

    vmem_limit = _vmem_limit_bytes()
    tl = block_l if block_l is not None else _default_block_l(
        length, c_in, d_model, itemsize, n, vmem_limit, single_buffer_params)
    num_l = pl.cdiv(length, tl)

    # Grid-invariant params: single-buffer when supported (constant index_map,
    # so extra pipeline buffers buy nothing — this frees VMEM for a larger tile).
    param_kwargs = {}
    if single_buffer_params:
        param_kwargs["pipeline_mode"] = pl.Buffered(1)
    w_spec = pl.BlockSpec((d_model, c_in), lambda i, j: (0, 0), **param_kwargs)
    b_spec = pl.BlockSpec((d_model, 1), lambda i, j: (0, 0), **param_kwargs)

    # Put the longer axis first so megacore sharding always has work to split.
    if num_l >= n:
        grid = (num_l, n)
        x_spec = pl.BlockSpec((None, c_in, tl), lambda l, b: (b, 0, l))
        o_spec = pl.BlockSpec((None, d_model, tl), lambda l, b: (b, 0, l))
    else:
        grid = (n, num_l)
        x_spec = pl.BlockSpec((None, c_in, tl), lambda b, l: (b, 0, l))
        o_spec = pl.BlockSpec((None, d_model, tl), lambda b, l: (b, 0, l))

    flops = 2 * n * length * c_in * d_model
    bytes_accessed = (itemsize * n * length * (c_in + d_model)
                      + itemsize * c_in * d_model + 4 * d_model)
    cost = pl.CostEstimate(flops=flops, transcendentals=0,
                           bytes_accessed=bytes_accessed)

    return pl.pallas_call(
        _projection_kernel,
        out_shape=jax.ShapeDtypeStruct((n, d_model, length), x.dtype),
        grid_spec=pltpu.PrefetchScalarGridSpec(
            num_scalar_prefetch=0,
            grid=grid,
            in_specs=[x_spec, w_spec, b_spec],
            out_specs=o_spec,
        ),
        compiler_params=pltpu.CompilerParams(
            dimension_semantics=("parallel", "parallel"),
            vmem_limit_bytes=vmem_limit,
        ),
        cost_estimate=cost,
    )(x, w2d, b2d)


_SINGLE_BUFFER_PARAMS_OK = None


def feature_projection(x, weight, bias, *, block_l=None):
    """Equivalent of nn.Conv1d(in_channels, d_model, kernel_size=1) forward.

    Args:
      x:      (N, C_in, L)          (PyTorch NCL layout)
      weight: (d_model, C_in, 1)    (PyTorch Conv1d weight layout)
      bias:   (d_model,)
    Returns:
      (N, d_model, L), same dtype as x.
    """
    global _SINGLE_BUFFER_PARAMS_OK
    if _SINGLE_BUFFER_PARAMS_OK is None:
        try:
            out = _feature_projection(x, weight, bias, block_l=block_l,
                                      single_buffer_params=True)
            jax.block_until_ready(out)
            _SINGLE_BUFFER_PARAMS_OK = True
            return out
        except Exception:
            # Older Pallas without per-operand pipeline_mode support.
            _SINGLE_BUFFER_PARAMS_OK = False
    return _feature_projection(x, weight, bias, block_l=block_l,
                               single_buffer_params=_SINGLE_BUFFER_PARAMS_OK)


def _reference(x, weight, bias):
    return jnp.einsum("ncl,dc->ndl", x, weight[:, :, 0]) + bias[None, :, None]


if __name__ == "__main__":
    key = jax.random.PRNGKey(0)
    kx, kw, kb, kx2 = jax.random.split(key, 4)

    # Small, module-consistent shapes.
    batch, in_channels, length = 2, 8, 16
    d_model = 32

    x = jax.random.normal(kx, (batch, in_channels, length), dtype=jnp.float32)
    fan_in = in_channels  # kernel_size == 1
    bound = 1.0 / (fan_in ** 0.5)
    weight = jax.random.uniform(
        kw, (d_model, in_channels, 1), minval=-bound, maxval=bound,
        dtype=jnp.float32)
    bias = jax.random.uniform(
        kb, (d_model,), minval=-bound, maxval=bound, dtype=jnp.float32)

    out = jax.block_until_ready(feature_projection(x, weight, bias))
    ref = _reference(x, weight, bias)
    assert out.shape == (batch, d_model, length), out.shape
    assert jnp.allclose(out, ref, atol=1e-5, rtol=1e-5), "mismatch vs reference"

    # Second case: ragged L exercising the masked partial edge tile
    # (no wrapper pad / slice anymore).
    length2 = 200
    x2 = jax.random.normal(kx2, (batch, in_channels, length2), dtype=jnp.float32)
    out2 = jax.block_until_ready(feature_projection(x2, weight, bias))
    ref2 = _reference(x2, weight, bias)
    assert out2.shape == (batch, d_model, length2), out2.shape
    assert jnp.allclose(out2, ref2, atol=1e-5, rtol=1e-5), "mismatch (ragged L)"

    print("KERNEL_OK")
</pallas_src>

<mosaic_0001>
module attributes {stable_mosaic.version = 11 : i64} {
  func.func @_projection_kernel(%arg0: i32, %arg1: i32, %arg2: memref<1x8x16xf32, #tpu.memory_space<vmem>>, %arg3: memref<32x8xf32, #tpu.memory_space<vmem>>, %arg4: memref<32x1xf32, #tpu.memory_space<vmem>>, %arg5: memref<1x32x16xf32, #tpu.memory_space<vmem>>) attributes {dimension_semantics = [#tpu.dimension_semantics<parallel>, #tpu.dimension_semantics<parallel>], iteration_bounds = array<i64: 2, 1>, scalar_prefetch = 0 : i64, scratch_operands = 0 : i64, tpu.core_type = #tpu.core_type<tc>, window_params = [{transform_indices = @transform_0, window_bounds = array<i64: 1, 8, 16>}, {pipeline_mode = #tpu.pipeline_mode<synchronous>, transform_indices = @transform_1, window_bounds = array<i64: 32, 8>}, {pipeline_mode = #tpu.pipeline_mode<synchronous>, transform_indices = @transform_2, window_bounds = array<i64: 32, 1>}, {transform_indices = @transform_3, window_bounds = array<i64: 1, 32, 16>}]} {
    %c0 = arith.constant 0 : index
    %c0_0 = arith.constant 0 : index
    %0 = vector.load %arg3[%c0, %c0_0] : memref<32x8xf32, #tpu.memory_space<vmem>>, vector<32x8xf32>
    %c0_1 = arith.constant 0 : index
    %c0_2 = arith.constant 0 : index
    %c0_3 = arith.constant 0 : index
    %1 = vector.load %arg2[%c0_1, %c0_2, %c0_3] : memref<1x8x16xf32, #tpu.memory_space<vmem>>, vector<1x8x16xf32>
    %2 = vector.shape_cast %1 : vector<1x8x16xf32> to vector<8x16xf32>
    %cst = arith.constant dense<0.000000e+00> : vector<32x16xf32>
    %3 = tpu.matmul %0, %2, %cst {dimension_numbers = #tpu.dot_dimension_numbers<[1], [0], [0], [1], [0, 0, 1, 1], [], []>} : vector<32x8xf32>, vector<8x16xf32>, vector<32x16xf32> -> vector<32x16xf32>
    %c0_4 = arith.constant 0 : index
    %c0_5 = arith.constant 0 : index
    %4 = vector.load %arg4[%c0_4, %c0_5] : memref<32x1xf32, #tpu.memory_space<vmem>>, vector<32x1xf32>
    %5 = vector.broadcast %4 : vector<32x1xf32> to vector<32x16xf32>
    %6 = arith.addf %3, %5 : vector<32x16xf32>
    %c0_6 = arith.constant 0 : index
    %c0_7 = arith.constant 0 : index
    %c0_8 = arith.constant 0 : index
    %7 = vector.load %arg5[%c0_6, %c0_7, %c0_8] : memref<1x32x16xf32, #tpu.memory_space<vmem>>, vector<1x32x16xf32>
    %8 = vector.shape_cast %7 : vector<1x32x16xf32> to vector<32x16xf32>
    %9 = vector.shape_cast %6 : vector<32x16xf32> to vector<1x32x16xf32>
    tpu.vector_store %arg5[%c0_6, %c0_7, %c0_8], %9 {strides = array<i32>} : memref<1x32x16xf32, #tpu.memory_space<vmem>>, vector<1x32x16xf32>,
    return
  }
  func.func @transform_0(%arg0: i32, %arg1: i32) -> (i32, i32, i32) {
    %c0_i32 = arith.constant 0 : i32
    %c0_i32_0 = arith.constant 0 : i32
    return %arg0, %c0_i32, %arg1 : i32, i32, i32
  }
  func.func @transform_1(%arg0: i32, %arg1: i32) -> (i32, i32) {
    %c0_i32 = arith.constant 0 : i32
    %c0_i32_0 = arith.constant 0 : i32
    %c0_i32_1 = arith.constant 0 : i32
    return %c0_i32, %c0_i32_0 : i32, i32
  }
  func.func @transform_2(%arg0: i32, %arg1: i32) -> (i32, i32) {
    %c0_i32 = arith.constant 0 : i32
    %c0_i32_0 = arith.constant 0 : i32
    %c0_i32_1 = arith.constant 0 : i32
    return %c0_i32, %c0_i32_0 : i32, i32
  }
  func.func @transform_3(%arg0: i32, %arg1: i32) -> (i32, i32, i32) {
    %c0_i32 = arith.constant 0 : i32
    %c0_i32_0 = arith.constant 0 : i32
    return %arg0, %c0_i32, %arg1 : i32, i32, i32
  }
}

module attributes {stable_mosaic.version = 11 : i64} {
  func.func @_projection_kernel(%arg0: i32, %arg1: i32, %arg2: memref<1x8x16xf32, #tpu.memory_space<vmem>>, %arg3: memref<32x8xf32, #tpu.memory_space<vmem>>, %arg4: memref<32x1xf32, #tpu.memory_space<vmem>>, %arg5: memref<1x32x16xf32, #tpu.memory_space<vmem>>) attributes {dimension_semantics = [#tpu.dimension_semantics<parallel>, #tpu.dimension_semantics<parallel>], iteration_bounds = array<i64: 2, 1>, scalar_prefetch = 0 : i64, scratch_operands = 0 : i64, tpu.core_type = #tpu.core_type<tc>, window_params = [{transform_indices = @transform_0, window_bounds = array<i64: 1, 8, 16>}, {pipeline_mode = #tpu.pipeline_mode<synchronous>, transform_indices = @transform_1, window_bounds = array<i64: 32, 8>}, {pipeline_mode = #tpu.pipeline_mode<synchronous>, transform_indices = @transform_2, window_bounds = array<i64: 32, 1>}, {transform_indices = @transform_3, window_bounds = array<i64: 1, 32, 16>}]} {
    %c0 = arith.constant 0 : index
    %c0_0 = arith.constant 0 : index
    %0 = vector.load %arg3[%c0, %c0_0] : memref<32x8xf32, #tpu.memory_space<vmem>>, vector<32x8xf32>
    %c0_1 = arith.constant 0 : index
    %c0_2 = arith.constant 0 : index
    %c0_3 = arith.constant 0 : index
    %1 = vector.load %arg2[%c0_1, %c0_2, %c0_3] : memref<1x8x16xf32, #tpu.memory_space<vmem>>, vector<1x8x16xf32>
    %2 = vector.shape_cast %1 : vector<1x8x16xf32> to vector<8x16xf32>
    %cst = arith.constant dense<0.000000e+00> : vector<32x16xf32>
    %3 = tpu.matmul %0, %2, %cst {dimension_numbers = #tpu.dot_dimension_numbers<[1], [0], [0], [1], [0, 0, 1, 1], [], []>} : vector<32x8xf32>, vector<8x16xf32>, vector<32x16xf32> -> vector<32x16xf32>
    %c0_4 = arith.constant 0 : index
    %c0_5 = arith.constant 0 : index
    %4 = vector.load %arg4[%c0_4, %c0_5] : memref<32x1xf32, #tpu.memory_space<vmem>>, vector<32x1xf32>
    %5 = vector.broadcast %4 : vector<32x1xf32> to vector<32x16xf32>
    %6 = arith.addf %3, %5 : vector<32x16xf32>
    %c0_6 = arith.constant 0 : index
    %c0_7 = arith.constant 0 : index
    %c0_8 = arith.constant 0 : index
    %7 = vector.load %arg5[%c0_6, %c0_7, %c0_8] : memref<1x32x16xf32, #tpu.memory_space<vmem>>, vector<1x32x16xf32>
    %8 = vector.shape_cast %7 : vector<1x32x16xf32> to vector<32x16xf32>
    %9 = vector.shape_cast %6 : vector<32x16xf32> to vector<1x32x16xf32>
    tpu.vector_store %arg5[%c0_6, %c0_7, %c0_8], %9 {strides = array<i32>} : memref<1x32x16xf32, #tpu.memory_space<vmem>>, vector<1x32x16xf32>,
    return
  }
  func.func @transform_0(%arg0: i32, %arg1: i32) -> (i32, i32, i32) {
    %c0_i32 = arith.constant 0 : i32
    %c0_i32_0 = arith.constant 0 : i32
    return %arg0, %c0_i32, %arg1 : i32, i32, i32
  }
  func.func @transform_1(%arg0: i32, %arg1: i32) -> (i32, i32) {
    %c0_i32 = arith.constant 0 : i32
    %c0_i32_0 = arith.constant 0 : i32
    %c0_i32_1 = arith.constant 0 : i32
    return %c0_i32, %c0_i32_0 : i32, i32
  }
  func.func @transform_2(%arg0: i32, %arg1: i32) -> (i32, i32) {
    %c0_i32 = arith.constant 0 : i32
    %c0_i32_0 = arith.constant 0 : i32
    %c0_i32_1 = arith.constant 0 : i32
    return %c0_i32, %c0_i32_0 : i32, i32
  }
  func.func @transform_3(%arg0: i32, %arg1: i32) -> (i32, i32, i32) {
    %c0_i32 = arith.constant 0 : i32
    %c0_i32_0 = arith.constant 0 : i32
    return %arg0, %c0_i32, %arg1 : i32, i32, i32
  }
}

</mosaic_0001>

<llo_original>
// kernel: _feature_projection.1
$region0: #{_feature_projection.1}
  #allocation0 [shape = 'u32[]', space=smem, size = 0x4, offset = 0x4, fixed_abs, tag = 'smem constant byte address 0x4 - core index']
  #allocation1 [shape = 'u32[72,128]{1,0:T(1,128)}', space=vmem, size = 0x9000, scoped, tag = 'internal scratch']
  %s0 = inlined_call_operand.vmem [shape: f32[2,8,16], index: 0, kind: input, shape index: {}]
  %s1 = inlined_call_operand.vmem [shape: f32[32,8], index: 1, kind: input, shape index: {}]
  %s2 = inlined_call_operand.vmem [shape: f32[32,1], index: 2, kind: input, shape index: {}]
  %s3 = inlined_call_operand.vmem [shape: f32[2,32,16], index: 3, kind: output, shape index: {}]
  %s4 = sld [smem:[#allocation0]]
  $region45: #{_feature_projection.1} parent=0
    _
  %s6 = ssub.s32 1, %s4
  %s7 = scalar_select 0, %s6, %s4
  loop: start=0, step=1, limit=4
  $region2: #{_feature_projection.1} parent=0 // loop_pre_header
    _
  $region3: #{_feature_projection.1} parent=0 // loop_header
    %s9 = sphi 0, %s13
    %p10 = scmp.ge.s32.totalorder %s9, 4
    %s16 = sphi 0, %s28
    %s17 = sphi 0, %s24
    %s18 = sphi 0, %s16
    %s19 = sphi 0, %s17
    %s20 = sphi 0, %s18
    %s21 = sphi 0, %s19
    %s33 = sphi 0, %s35
    %s36 = sphi 0, %s33
    %s37 = sphi 0, %s36
    %s53 = sphi 0, %s37
    %s57 = sphi 0, %s57
    %s59 = sphi 0, %s57
    %s60 = sphi 0, %s59
    %s74 = sphi 0, %s60
    %s78 = sphi 0, %s78
    %s80 = sphi 0, %s78
    %s81 = sphi 0, %s80
    %s95 = sphi 0, %s81
    %s103 = sphi 0, %s105
    %s106 = sphi 0, %s103
    %s107 = sphi 0, %s106
    %s123 = sphi 0, %s107
  $region4: #{_feature_projection.1} parent=0 // loop_header_branch
    %12 = sbr.rel (%p10) target = $region8
  $region5: #{_feature_projection.1} parent=0 // loop_body
    %s14 = ssub.s32 %s9, 1
    %s15 = ssub.s32 %s9, 2
    %s22 = sadd.s32 1, %s17
    %p23 = scmp.ge.s32.totalorder %s22, 1
    %s24 = scalar_select %p23, 0, %s22
    %s25 = sadd.s32 1, %s16
    %s26 = scalar_select %p23, %s25, %s16
    %p27 = scmp.ge.s32.totalorder %s26, 2
    %s28 = scalar_select %p27, 0, %s26
    %s29 = ssub.s32 %s16, %s28
    %s30 = ssub.s32 %s17, %s24
    %s31 = sor.u32 %s29, %s30
    %p32 = scmp.eq.s32.totalorder %s31, 0
    %s34 = sadd.s32 %s33, 1
    %s35 = scalar_select %p32, %s33, %s34
    %p38 = pneg %p32
    %p39 = scmp.eq.s32.totalorder %s9, 1
    %p40 = por %p38, %p39
    %p41 = scmp.ne.s32.totalorder %s33, %s36
    %p42 = scmp.eq.s32.totalorder %s9, 0
    %p43 = por %p41, %p42
    %p44 = scmp.ne.s32.totalorder %s33, %s36
    %p45 = scmp.eq.s32.totalorder %s14, 1
    %p46 = por %p44, %p45
    %p47 = scmp.ne.s32.totalorder %s36, %s37
    %p48 = scmp.eq.s32.totalorder %s14, 0
    %p49 = por %p47, %p48
    %p50 = scmp.ne.s32.totalorder %s36, %s37
    %p51 = scmp.eq.s32.totalorder %s15, 1
    %p52 = por %p50, %p51
    %p54 = scmp.ne.s32.totalorder %s37, %s53
    %p55 = scmp.eq.s32.totalorder %s15, 0
    %p56 = por %p54, %p55
    %s58 = sadd.s32 %s57, 1
    %p61 = scmp.eq.s32.totalorder %s9, 1
    %p62 = scmp.ne.s32.totalorder %s57, %s59
    %p63 = scmp.eq.s32.totalorder %s9, 0
    %p64 = por %p62, %p63
    %p65 = scmp.ne.s32.totalorder %s57, %s59
    %p66 = scmp.eq.s32.totalorder %s14, 1
    %p67 = por %p65, %p66
    %p68 = scmp.ne.s32.totalorder %s59, %s60
    %p69 = scmp.eq.s32.totalorder %s14, 0
    %p70 = por %p68, %p69
    %p71 = scmp.ne.s32.totalorder %s59, %s60
    %p72 = scmp.eq.s32.totalorder %s15, 1
    %p73 = por %p71, %p72
    %p75 = scmp.ne.s32.totalorder %s60, %s74
    %p76 = scmp.eq.s32.totalorder %s15, 0
    %p77 = por %p75, %p76
    %s79 = sadd.s32 %s78, 1
    %p82 = scmp.eq.s32.totalorder %s9, 1
    %p83 = scmp.ne.s32.totalorder %s78, %s80
    %p84 = scmp.eq.s32.totalorder %s9, 0
    %p85 = por %p83, %p84
    %p86 = scmp.ne.s32.totalorder %s78, %s80
    %p87 = scmp.eq.s32.totalorder %s14, 1
    %p88 = por %p86, %p87
    %p89 = scmp.ne.s32.totalorder %s80, %s81
    %p90 = scmp.eq.s32.totalorder %s14, 0
    %p91 = por %p89, %p90
    %p92 = scmp.ne.s32.totalorder %s80, %s81
    %p93 = scmp.eq.s32.totalorder %s15, 1
    %p94 = por %p92, %p93
    %p96 = scmp.ne.s32.totalorder %s81, %s95
    %p97 = scmp.eq.s32.totalorder %s15, 0
    %p98 = por %p96, %p97
    %s99 = ssub.s32 %s16, %s28
    %s100 = ssub.s32 %s17, %s24
    %s101 = sor.u32 %s99, %s100
    %p102 = scmp.eq.s32.totalorder %s101, 0
    %s104 = sadd.s32 %s103, 1
    %s105 = scalar_select %p102, %s103, %s104
    %p108 = pneg %p102
    %p109 = scmp.eq.s32.totalorder %s9, 1
    %p110 = por %p108, %p109
    %p111 = scmp.ne.s32.totalorder %s103, %s106
    %p112 = scmp.eq.s32.totalorder %s9, 0
    %p113 = por %p111, %p112
    %p114 = scmp.ne.s32.totalorder %s103, %s106
    %p115 = scmp.eq.s32.totalorder %s14, 1
    %p116 = por %p114, %p115
    %p117 = scmp.ne.s32.totalorder %s106, %s107
    %p118 = scmp.eq.s32.totalorder %s14, 0
    %p119 = por %p117, %p118
    %p120 = scmp.ne.s32.totalorder %s106, %s107
    %p121 = scmp.eq.s32.totalorder %s15, 1
    %p122 = por %p120, %p121
    %p124 = scmp.ne.s32.totalorder %s107, %s123
    %p125 = scmp.eq.s32.totalorder %s15, 0
    %p126 = por %p124, %p125
    %p127 = scmp.le.s32.totalorder 1, %s9
    %p128 = scmp.lt.s32.totalorder %s9, 3
    %p129 = pnand %p127, %p128
    %p130 = pneg %p129
    // Predicated region
    $region9: #{_feature_projection.1} parent=5 // pred_check
      _
    $region10: #{_feature_projection.1} parent=5 // pred_check_branch
      %132 = sbr.rel (%p129) target = $region12
    $region11: #{_feature_projection.1} parent=5 // pred_region
      %s133 = ssub.s32 %s9, 1
      // Predicated region
      $region13: #{_feature_projection.1} parent=11 // pred_check
        %p134 = pneg %p70
      $region14: #{_feature_projection.1} parent=11 // pred_check_branch
        %136 = sbr.rel (%p134) target = $region16
      $region15: #{_feature_projection.1} parent=11 // pred_region
        _
      $region16: #{_feature_projection.1} parent=11 // pred_fallthru
        _
      // Predicated region
      $region17: #{_feature_projection.1} parent=11 // pred_check
        %p137 = pneg %p91
      $region18: #{_feature_projection.1} parent=11 // pred_check_branch
        %139 = sbr.rel (%p137) target = $region20
      $region19: #{_feature_projection.1} parent=11 // pred_region
        _
      $region20: #{_feature_projection.1} parent=11 // pred_fallthru
        _
    $region12: #{_feature_projection.1} parent=5 // pred_fallthru
      _
    %p140 = scmp.lt.s32.totalorder %s9, 2
    // Predicated region
    $region21: #{_feature_projection.1} parent=5 // pred_check
      %p141 = pneg %p140
    $region22: #{_feature_projection.1} parent=5 // pred_check_branch
      %143 = sbr.rel (%p141) target = $region24
    $region23: #{_feature_projection.1} parent=5 // pred_region
      // Predicated region
      $region25: #{_feature_projection.1} parent=23 // pred_check
        %p144 = pneg %p43
      $region26: #{_feature_projection.1} parent=23 // pred_check_branch
        %146 = sbr.rel (%p144) target = $region28
      $region27: #{_feature_projection.1} parent=23 // pred_region
        %p147 = scmp.lt.s32.totalorder %s16, 1
        %s148 = scalar_select %p147, %s16, 1
        %p149 = scmp.lt.s32.totalorder %s17, 0
        %s150 = scalar_select %p149, %s17, 0
        %s151 = sadd.s32 %s150, %s148
        %s152 = smul.addr %s151, 8
        %s153 = scalar_lea.vmem %s0, %s152
      $region28: #{_feature_projection.1} parent=23 // pred_fallthru
        _
    $region24: #{_feature_projection.1} parent=5 // pred_fallthru
      _
    %p154 = scmp.le.s32.totalorder 1, %s9
    %p155 = scmp.lt.s32.totalorder %s9, 3
    %p156 = pnand %p154, %p155
    %p157 = pneg %p156
    // Predicated region
    $region29: #{_feature_projection.1} parent=5 // pred_check
      _
    $region30: #{_feature_projection.1} parent=5 // pred_check_branch
      %159 = sbr.rel (%p156) target = $region32
    $region31: #{_feature_projection.1} parent=5 // pred_region
      %s160 = ssub.s32 %s9, 1
      %p161 = scmp.lt.s32.totalorder %s18, 1
      %s162 = scalar_select %p161, %s18, 1
      %p163 = scmp.lt.s32.totalorder %s19, 0
      %s164 = scalar_select %p163, %s19, 0
      %s165 = sadd.s32 %s164, %s162
      %s166 = smul.addr %s165, 8
      %s167 = scalar_lea.vmem %s0, %s166
      %p168 = pneg %p49
      %p169 = pneg %p46
      %p170 = pneg %p70
      %p171 = pneg %p67
      %p172 = pneg %p91
      %p173 = pneg %p88
      %p174 = pneg %p119
      %p175 = pneg %p116
      %p176 = scmp.lt.s32.totalorder %s18, 1
      %s177 = scalar_select %p176, %s18, 1
      %p178 = scmp.lt.s32.totalorder %s19, 0
      %s179 = scalar_select %p178, %s19, 0
      %s180 = smul.addr %s177, 4
      %s181 = sadd.s32 %s179, %s180
      %s182 = smul.addr %s181, 8
      %s183 = scalar_lea.vmem %s3, %s182
      %p184 = scmp.lt.s32.totalorder %s18, 1
      %s185 = scalar_select %p184, %s18, 1
      %p186 = scmp.lt.s32.totalorder %s19, 0
      %s187 = scalar_select %p186, %s19, 0
      %s188 = sadd.s32 %s187, %s185
      %s189 = smul.addr %s188, 8
      %s190 = scalar_lea.vmem %s0, %s189
      %p191 = scmp.lt.s32.totalorder %s18, 1
      %s192 = scalar_select %p191, %s18, 1
      %p193 = scmp.lt.s32.totalorder %s19, 0
      %s194 = scalar_select %p193, %s19, 0
      %s195 = smul.addr %s192, 4
      %s196 = sadd.s32 %s194, %s195
      %s197 = smul.addr %s196, 8
      %s198 = scalar_lea.vmem %s3, %s197
      %v199 = vld [vmem:[%s1] sm:$0xff]
      %v200 = vld [vmem:[%s1 + $0x8] sm:$0xff]
      %v201 = vld [vmem:[%s1 + $0x10] sm:$0xff]
      %v202 = vld [vmem:[%s1 + $0x18] sm:$0xff]
      %v203 = vld [vmem:[%s190] sm:$0xff]
      %v204 = vld [vmem:[%s2] sm:$0xff]
      %v205 = vld [vmem:[%s2 + $0x8] sm:$0xff]
      %v206 = vld [vmem:[%s2 + $0x10] sm:$0xff]
      %v207 = vld [vmem:[%s2 + $0x18] sm:$0xff]
      %209 = vset.pattern.permute.xlu0 0
      %210 = vperm.xlu0 %209, %v204
      %v211 = vpop.permute.xlu0 %210
      %214 = vset.pattern.permute.xlu0 0
      %215 = vperm.xlu0 %214, %v205
      %v216 = vpop.permute.xlu0 %215
      %219 = vset.pattern.permute.xlu0 0
      %220 = vperm.xlu0 %219, %v206
      %v221 = vpop.permute.xlu0 %220
      %224 = vset.pattern.permute.xlu0 0
      %225 = vperm.xlu0 %224, %v207
      %v226 = vpop.permute.xlu0 %225
      %vm228 = vcmask 64512
      %v230 = vsel %vm228, %v199, 0
      %v233 = vsel %vm228, %v200, 0
      %v236 = vsel %vm228, %v201, 0
      %v239 = vsel %vm228, %v202, 0
      %241 = vmatpush.msra.mxu0 0.0
      %242 = vmatpush.msra.mxu0 0.0
      %243 = vmatpush.msra.mxu0 0.0
      %244 = vmatpush.msra.mxu0 0.0
      %245 = vmatpush.msra.mxu0 0.0
      %246 = vmatpush.msra.mxu0 0.0
      %247 = vmatpush.msra.mxu0 0.0
      %248 = vmatpush.msra.mxu0 0.0
      %249 = vmatpush.msra.mxu0 0.0
      %250 = vmatpush.msra.mxu0 0.0
      %251 = vmatpush.msra.mxu0 0.0
      %252 = vmatpush.msra.mxu0 0.0
      %253 = vmatpush.msra.mxu0 0.0
      %254 = vmatpush.msra.mxu0 0.0
      %255 = vmatpush.msra.mxu0 0.0
      %256 = vmatpush.msra.mxu0 %v203
      %257 = vmatmul.f32.gmra.mxu0 %v230
      %v258 = vpop.f32.mrf.mxu0
      %v259 = vadd.f32 %v211, %v258
      %260 = vmatmul.f32.gmra.mxu0 %v233
      %v261 = vpop.f32.mrf.mxu0
      %v262 = vadd.f32 %v216, %v261
      %263 = vmatmul.f32.gmra.mxu0 %v236
      %v264 = vpop.f32.mrf.mxu0
      %v265 = vadd.f32 %v221, %v264
      %266 = vmatmul.f32.gmra.mxu0 %v239
      %v267 = vpop.f32.mrf.mxu0
      %v268 = vadd.f32 %v226, %v267
      %269 = vdwg.mxu0
      %vm270 = vcmask 130048
      %271 = vst.msk [vmem:[%s198] sm:$0xff] %vm270, %v259
      %272 = vst.msk [vmem:[%s198 + $0x8] sm:$0xff] %vm270, %v262
      %273 = vst.msk [vmem:[%s198 + $0x10] sm:$0xff] %vm270, %v265
      %274 = vst.msk [vmem:[%s198 + $0x18] sm:$0xff] %vm270, %v268
      %p275 = scmp.lt.s32.totalorder %s18, 1
      %s276 = scalar_select %p275, %s18, 1
      %p277 = scmp.lt.s32.totalorder %s19, 0
      %s278 = scalar_select %p277, %s19, 0
      %s279 = smul.addr %s276, 4
      %s280 = sadd.s32 %s278, %s279
      %s281 = smul.addr %s280, 8
      %s282 = scalar_lea.vmem %s3, %s281
      // Predicated region
      $region33: #{_feature_projection.1} parent=31 // pred_check
        %p283 = pneg %p116
      $region34: #{_feature_projection.1} parent=31 // pred_check_branch
        %285 = sbr.rel (%p283) target = $region36
      $region35: #{_feature_projection.1} parent=31 // pred_region
        _
      $region36: #{_feature_projection.1} parent=31 // pred_fallthru
        _
    $region32: #{_feature_projection.1} parent=5 // pred_fallthru
      _
    %p286 = scmp.le.s32.totalorder 2, %s9
    // Predicated region
    $region37: #{_feature_projection.1} parent=5 // pred_check
      %p287 = pneg %p286
    $region38: #{_feature_projection.1} parent=5 // pred_check_branch
      %289 = sbr.rel (%p287) target = $region40
    $region39: #{_feature_projection.1} parent=5 // pred_region
      %s290 = ssub.s32 %s9, 2
      // Predicated region
      $region41: #{_feature_projection.1} parent=39 // pred_check
        %p291 = pneg %p122
      $region42: #{_feature_projection.1} parent=39 // pred_check_branch
        %293 = sbr.rel (%p291) target = $region44
      $region43: #{_feature_projection.1} parent=39 // pred_region
        %p294 = scmp.lt.s32.totalorder %s20, 1
        %s295 = scalar_select %p294, %s20, 1
        %p296 = scmp.lt.s32.totalorder %s21, 0
        %s297 = scalar_select %p296, %s21, 0
        %s298 = smul.addr %s295, 4
        %s299 = sadd.s32 %s297, %s298
        %s300 = smul.addr %s299, 8
        %s301 = scalar_lea.vmem %s3, %s300
      $region44: #{_feature_projection.1} parent=39 // pred_fallthru
        _
    $region40: #{_feature_projection.1} parent=5 // pred_fallthru
      _
  $region6: #{_feature_projection.1} parent=0 // loop_footer
    %s13 = sadd.s32 1, %s9
  $region7: #{_feature_projection.1} parent=0 // loop_footer_branch
    %8 = sbr.rel target = $region3
  $region8: #{_feature_projection.1} parent=0 // loop_exit
    _

// kernel: _feature_projection.1
$region0: #{_feature_projection.1}
  #allocation0 [shape = 'u32[]', space=smem, size = 0x4, offset = 0x4, fixed_abs, tag = 'smem constant byte address 0x4 - core index']
  #allocation1 [shape = 'u32[72,128]{1,0:T(1,128)}', space=vmem, size = 0x9000, scoped, tag = 'internal scratch']
  %s0 = inlined_call_operand.vmem [shape: f32[2,8,16], index: 0, kind: input, shape index: {}]
  %s1 = inlined_call_operand.vmem [shape: f32[32,8], index: 1, kind: input, shape index: {}]
  %s2 = inlined_call_operand.vmem [shape: f32[32,1], index: 2, kind: input, shape index: {}]
  %s3 = inlined_call_operand.vmem [shape: f32[2,32,16], index: 3, kind: output, shape index: {}]
  %s4 = sld [smem:[#allocation0]]
  $region45: #{_feature_projection.1} parent=0
    _
  %s6 = ssub.s32 1, %s4
  %s7 = scalar_select 0, %s6, %s4
  loop: start=0, step=1, limit=4
  $region2: #{_feature_projection.1} parent=0 // loop_pre_header
    _
  $region3: #{_feature_projection.1} parent=0 // loop_header
    %s9 = sphi 0, %s13
    %p10 = scmp.ge.s32.totalorder %s9, 4
    %s16 = sphi 0, %s28
    %s17 = sphi 0, %s24
    %s18 = sphi 0, %s16
    %s19 = sphi 0, %s17
    %s20 = sphi 0, %s18
    %s21 = sphi 0, %s19
    %s33 = sphi 0, %s35
    %s36 = sphi 0, %s33
    %s37 = sphi 0, %s36
    %s53 = sphi 0, %s37
    %s57 = sphi 0, %s57
    %s59 = sphi 0, %s57
    %s60 = sphi 0, %s59
    %s74 = sphi 0, %s60
    %s78 = sphi 0, %s78
    %s80 = sphi 0, %s78
    %s81 = sphi 0, %s80
    %s95 = sphi 0, %s81
    %s103 = sphi 0, %s105
    %s106 = sphi 0, %s103
    %s107 = sphi 0, %s106
    %s123 = sphi 0, %s107
  $region4: #{_feature_projection.1} parent=0 // loop_header_branch
    %12 = sbr.rel (%p10) target = $region8
  $region5: #{_feature_projection.1} parent=0 // loop_body
    %s14 = ssub.s32 %s9, 1
    %s15 = ssub.s32 %s9, 2
    %s22 = sadd.s32 1, %s17
    %p23 = scmp.ge.s32.totalorder %s22, 1
    %s24 = scalar_select %p23, 0, %s22
    %s25 = sadd.s32 1, %s16
    %s26 = scalar_select %p23, %s25, %s16
    %p27 = scmp.ge.s32.totalorder %s26, 2
    %s28 = scalar_select %p27, 0, %s26
    %s29 = ssub.s32 %s16, %s28
    %s30 = ssub.s32 %s17, %s24
    %s31 = sor.u32 %s29, %s30
    %p32 = scmp.eq.s32.totalorder %s31, 0
    %s34 = sadd.s32 %s33, 1
    %s35 = scalar_select %p32, %s33, %s34
    %p38 = pneg %p32
    %p39 = scmp.eq.s32.totalorder %s9, 1
    %p40 = por %p38, %p39
    %p41 = scmp.ne.s32.totalorder %s33, %s36
    %p42 = scmp.eq.s32.totalorder %s9, 0
    %p43 = por %p41, %p42
    %p44 = scmp.ne.s32.totalorder %s33, %s36
    %p45 = scmp.eq.s32.totalorder %s14, 1
    %p46 = por %p44, %p45
    %p47 = scmp.ne.s32.totalorder %s36, %s37
    %p48 = scmp.eq.s32.totalorder %s14, 0
    %p49 = por %p47, %p48
    %p50 = scmp.ne.s32.totalorder %s36, %s37
    %p51 = scmp.eq.s32.totalorder %s15, 1
    %p52 = por %p50, %p51
    %p54 = scmp.ne.s32.totalorder %s37, %s53
    %p55 = scmp.eq.s32.totalorder %s15, 0
    %p56 = por %p54, %p55
    %s58 = sadd.s32 %s57, 1
    %p61 = scmp.eq.s32.totalorder %s9, 1
    %p62 = scmp.ne.s32.totalorder %s57, %s59
    %p63 = scmp.eq.s32.totalorder %s9, 0
    %p64 = por %p62, %p63
    %p65 = scmp.ne.s32.totalorder %s57, %s59
    %p66 = scmp.eq.s32.totalorder %s14, 1
    %p67 = por %p65, %p66
    %p68 = scmp.ne.s32.totalorder %s59, %s60
    %p69 = scmp.eq.s32.totalorder %s14, 0
    %p70 = por %p68, %p69
    %p71 = scmp.ne.s32.totalorder %s59, %s60
    %p72 = scmp.eq.s32.totalorder %s15, 1
    %p73 = por %p71, %p72
    %p75 = scmp.ne.s32.totalorder %s60, %s74
    %p76 = scmp.eq.s32.totalorder %s15, 0
    %p77 = por %p75, %p76
    %s79 = sadd.s32 %s78, 1
    %p82 = scmp.eq.s32.totalorder %s9, 1
    %p83 = scmp.ne.s32.totalorder %s78, %s80
    %p84 = scmp.eq.s32.totalorder %s9, 0
    %p85 = por %p83, %p84
    %p86 = scmp.ne.s32.totalorder %s78, %s80
    %p87 = scmp.eq.s32.totalorder %s14, 1
    %p88 = por %p86, %p87
    %p89 = scmp.ne.s32.totalorder %s80, %s81
    %p90 = scmp.eq.s32.totalorder %s14, 0
    %p91 = por %p89, %p90
    %p92 = scmp.ne.s32.totalorder %s80, %s81
    %p93 = scmp.eq.s32.totalorder %s15, 1
    %p94 = por %p92, %p93
    %p96 = scmp.ne.s32.totalorder %s81, %s95
    %p97 = scmp.eq.s32.totalorder %s15, 0
    %p98 = por %p96, %p97
    %s99 = ssub.s32 %s16, %s28
    %s100 = ssub.s32 %s17, %s24
    %s101 = sor.u32 %s99, %s100
    %p102 = scmp.eq.s32.totalorder %s101, 0
    %s104 = sadd.s32 %s103, 1
    %s105 = scalar_select %p102, %s103, %s104
    %p108 = pneg %p102
    %p109 = scmp.eq.s32.totalorder %s9, 1
    %p110 = por %p108, %p109
    %p111 = scmp.ne.s32.totalorder %s103, %s106
    %p112 = scmp.eq.s32.totalorder %s9, 0
    %p113 = por %p111, %p112
    %p114 = scmp.ne.s32.totalorder %s103, %s106
    %p115 = scmp.eq.s32.totalorder %s14, 1
    %p116 = por %p114, %p115
    %p117 = scmp.ne.s32.totalorder %s106, %s107
    %p118 = scmp.eq.s32.totalorder %s14, 0
    %p119 = por %p117, %p118
    %p120 = scmp.ne.s32.totalorder %s106, %s107
    %p121 = scmp.eq.s32.totalorder %s15, 1
    %p122 = por %p120, %p121
    %p124 = scmp.ne.s32.totalorder %s107, %s123
    %p125 = scmp.eq.s32.totalorder %s15, 0
    %p126 = por %p124, %p125
    %p127 = scmp.le.s32.totalorder 1, %s9
    %p128 = scmp.lt.s32.totalorder %s9, 3
    %p129 = pnand %p127, %p128
    %p130 = pneg %p129
    // Predicated region
    $region9: #{_feature_projection.1} parent=5 // pred_check
      _
    $region10: #{_feature_projection.1} parent=5 // pred_check_branch
      %132 = sbr.rel (%p129) target = $region12
    $region11: #{_feature_projection.1} parent=5 // pred_region
      %s133 = ssub.s32 %s9, 1
      // Predicated region
      $region13: #{_feature_projection.1} parent=11 // pred_check
        %p134 = pneg %p70
      $region14: #{_feature_projection.1} parent=11 // pred_check_branch
        %136 = sbr.rel (%p134) target = $region16
      $region15: #{_feature_projection.1} parent=11 // pred_region
        _
      $region16: #{_feature_projection.1} parent=11 // pred_fallthru
        _
      // Predicated region
      $region17: #{_feature_projection.1} parent=11 // pred_check
        %p137 = pneg %p91
      $region18: #{_feature_projection.1} parent=11 // pred_check_branch
        %139 = sbr.rel (%p137) target = $region20
      $region19: #{_feature_projection.1} parent=11 // pred_region
        _
      $region20: #{_feature_projection.1} parent=11 // pred_fallthru
        _
    $region12: #{_feature_projection.1} parent=5 // pred_fallthru
      _
    %p140 = scmp.lt.s32.totalorder %s9, 2
    // Predicated region
    $region21: #{_feature_projection.1} parent=5 // pred_check
      %p141 = pneg %p140
    $region22: #{_feature_projection.1} parent=5 // pred_check_branch
      %143 = sbr.rel (%p141) target = $region24
    $region23: #{_feature_projection.1} parent=5 // pred_region
      // Predicated region
      $region25: #{_feature_projection.1} parent=23 // pred_check
        %p144 = pneg %p43
      $region26: #{_feature_projection.1} parent=23 // pred_check_branch
        %146 = sbr.rel (%p144) target = $region28
      $region27: #{_feature_projection.1} parent=23 // pred_region
        %p147 = scmp.lt.s32.totalorder %s16, 1
        %s148 = scalar_select %p147, %s16, 1
        %p149 = scmp.lt.s32.totalorder %s17, 0
        %s150 = scalar_select %p149, %s17, 0
        %s151 = sadd.s32 %s150, %s148
        %s152 = smul.addr %s151, 8
        %s153 = scalar_lea.vmem %s0, %s152
      $region28: #{_feature_projection.1} parent=23 // pred_fallthru
        _
    $region24: #{_feature_projection.1} parent=5 // pred_fallthru
      _
    %p154 = scmp.le.s32.totalorder 1, %s9
    %p155 = scmp.lt.s32.totalorder %s9, 3
    %p156 = pnand %p154, %p155
    %p157 = pneg %p156
    // Predicated region
    $region29: #{_feature_projection.1} parent=5 // pred_check
      _
    $region30: #{_feature_projection.1} parent=5 // pred_check_branch
      %159 = sbr.rel (%p156) target = $region32
    $region31: #{_feature_projection.1} parent=5 // pred_region
      %s160 = ssub.s32 %s9, 1
      %p161 = scmp.lt.s32.totalorder %s18, 1
      %s162 = scalar_select %p161, %s18, 1
      %p163 = scmp.lt.s32.totalorder %s19, 0
      %s164 = scalar_select %p163, %s19, 0
      %s165 = sadd.s32 %s164, %s162
      %s166 = smul.addr %s165, 8
      %s167 = scalar_lea.vmem %s0, %s166
      %p168 = pneg %p49
      %p169 = pneg %p46
      %p170 = pneg %p70
      %p171 = pneg %p67
      %p172 = pneg %p91
      %p173 = pneg %p88
      %p174 = pneg %p119
      %p175 = pneg %p116
      %p176 = scmp.lt.s32.totalorder %s18, 1
      %s177 = scalar_select %p176, %s18, 1
      %p178 = scmp.lt.s32.totalorder %s19, 0
      %s179 = scalar_select %p178, %s19, 0
      %s180 = smul.addr %s177, 4
      %s181 = sadd.s32 %s179, %s180
      %s182 = smul.addr %s181, 8
      %s183 = scalar_lea.vmem %s3, %s182
      %p184 = scmp.lt.s32.totalorder %s18, 1
      %s185 = scalar_select %p184, %s18, 1
      %p186 = scmp.lt.s32.totalorder %s19, 0
      %s187 = scalar_select %p186, %s19, 0
      %s188 = sadd.s32 %s187, %s185
      %s189 = smul.addr %s188, 8
      %s190 = scalar_lea.vmem %s0, %s189
      %p191 = scmp.lt.s32.totalorder %s18, 1
      %s192 = scalar_select %p191, %s18, 1
      %p193 = scmp.lt.s32.totalorder %s19, 0
      %s194 = scalar_select %p193, %s19, 0
      %s195 = smul.addr %s192, 4
      %s196 = sadd.s32 %s194, %s195
      %s197 = smul.addr %s196, 8
      %s198 = scalar_lea.vmem %s3, %s197
      %v199 = vld [vmem:[%s1] sm:$0xff]
      %v200 = vld [vmem:[%s1 + $0x8] sm:$0xff]
      %v201 = vld [vmem:[%s1 + $0x10] sm:$0xff]
      %v202 = vld [vmem:[%s1 + $0x18] sm:$0xff]
      %v203 = vld [vmem:[%s190] sm:$0xff]
      %v204 = vld [vmem:[%s2] sm:$0xff]
      %v205 = vld [vmem:[%s2 + $0x8] sm:$0xff]
      %v206 = vld [vmem:[%s2 + $0x10] sm:$0xff]
      %v207 = vld [vmem:[%s2 + $0x18] sm:$0xff]
      %209 = vset.pattern.permute.xlu0 0
      %210 = vperm.xlu0 %209, %v204
      %v211 = vpop.permute.xlu0 %210
      %214 = vset.pattern.permute.xlu0 0
      %215 = vperm.xlu0 %214, %v205
      %v216 = vpop.permute.xlu0 %215
      %219 = vset.pattern.permute.xlu0 0
      %220 = vperm.xlu0 %219, %v206
      %v221 = vpop.permute.xlu0 %220
      %224 = vset.pattern.permute.xlu0 0
      %225 = vperm.xlu0 %224, %v207
      %v226 = vpop.permute.xlu0 %225
      %vm228 = vcmask 64512
      %v230 = vsel %vm228, %v199, 0
      %v233 = vsel %vm228, %v200, 0
      %v236 = vsel %vm228, %v201, 0
      %v239 = vsel %vm228, %v202, 0
      %241 = vmatpush.msra.mxu0 0.0
      %242 = vmatpush.msra.mxu0 0.0
      %243 = vmatpush.msra.mxu0 0.0
      %244 = vmatpush.msra.mxu0 0.0
      %245 = vmatpush.msra.mxu0 0.0
      %246 = vmatpush.msra.mxu0 0.0
      %247 = vmatpush.msra.mxu0 0.0
      %248 = vmatpush.msra.mxu0 0.0
      %249 = vmatpush.msra.mxu0 0.0
      %250 = vmatpush.msra.mxu0 0.0
      %251 = vmatpush.msra.mxu0 0.0
      %252 = vmatpush.msra.mxu0 0.0
      %253 = vmatpush.msra.mxu0 0.0
      %254 = vmatpush.msra.mxu0 0.0
      %255 = vmatpush.msra.mxu0 0.0
      %256 = vmatpush.msra.mxu0 %v203
      %257 = vmatmul.f32.gmra.mxu0 %v230
      %v258 = vpop.f32.mrf.mxu0
      %v259 = vadd.f32 %v211, %v258
      %260 = vmatmul.f32.gmra.mxu0 %v233
      %v261 = vpop.f32.mrf.mxu0
      %v262 = vadd.f32 %v216, %v261
      %263 = vmatmul.f32.gmra.mxu0 %v236
      %v264 = vpop.f32.mrf.mxu0
      %v265 = vadd.f32 %v221, %v264
      %266 = vmatmul.f32.gmra.mxu0 %v239
      %v267 = vpop.f32.mrf.mxu0
      %v268 = vadd.f32 %v226, %v267
      %269 = vdwg.mxu0
      %vm270 = vcmask 130048
      %271 = vst.msk [vmem:[%s198] sm:$0xff] %vm270, %v259
      %272 = vst.msk [vmem:[%s198 + $0x8] sm:$0xff] %vm270, %v262
      %273 = vst.msk [vmem:[%s198 + $0x10] sm:$0xff] %vm270, %v265
      %274 = vst.msk [vmem:[%s198 + $0x18] sm:$0xff] %vm270, %v268
      %p275 = scmp.lt.s32.totalorder %s18, 1
      %s276 = scalar_select %p275, %s18, 1
      %p277 = scmp.lt.s32.totalorder %s19, 0
      %s278 = scalar_select %p277, %s19, 0
      %s279 = smul.addr %s276, 4
      %s280 = sadd.s32 %s278, %s279
      %s281 = smul.addr %s280, 8
      %s282 = scalar_lea.vmem %s3, %s281
      // Predicated region
      $region33: #{_feature_projection.1} parent=31 // pred_check
        %p283 = pneg %p116
      $region34: #{_feature_projection.1} parent=31 // pred_check_branch
        %285 = sbr.rel (%p283) target = $region36
      $region35: #{_feature_projection.1} parent=31 // pred_region
        _
      $region36: #{_feature_projection.1} parent=31 // pred_fallthru
        _
    $region32: #{_feature_projection.1} parent=5 // pred_fallthru
      _
    %p286 = scmp.le.s32.totalorder 2, %s9
    // Predicated region
    $region37: #{_feature_projection.1} parent=5 // pred_check
      %p287 = pneg %p286
    $region38: #{_feature_projection.1} parent=5 // pred_check_branch
      %289 = sbr.rel (%p287) target = $region40
    $region39: #{_feature_projection.1} parent=5 // pred_region
      %s290 = ssub.s32 %s9, 2
      // Predicated region
      $region41: #{_feature_projection.1} parent=39 // pred_check
        %p291 = pneg %p122
      $region42: #{_feature_projection.1} parent=39 // pred_check_branch
        %293 = sbr.rel (%p291) target = $region44
      $region43: #{_feature_projection.1} parent=39 // pred_region
        %p294 = scmp.lt.s32.totalorder %s20, 1
        %s295 = scalar_select %p294, %s20, 1
        %p296 = scmp.lt.s32.totalorder %s21, 0
        %s297 = scalar_select %p296, %s21, 0
        %s298 = smul.addr %s295, 4
        %s299 = sadd.s32 %s297, %s298
        %s300 = smul.addr %s299, 8
        %s301 = scalar_lea.vmem %s3, %s300
      $region44: #{_feature_projection.1} parent=39 // pred_fallthru
        _
    $region40: #{_feature_projection.1} parent=5 // pred_fallthru
      _
  $region6: #{_feature_projection.1} parent=0 // loop_footer
    %s13 = sadd.s32 1, %s9
  $region7: #{_feature_projection.1} parent=0 // loop_footer_branch
    %8 = sbr.rel target = $region3
  $region8: #{_feature_projection.1} parent=0 // loop_exit
    _

</llo_original>
